<compile_context>
chip_gen: v7x
topology: tpu7x:2x2x1
jax: 0.10.0
libtpu: 0.0.40
codegen_flags: <defaults>
</compile_context>

<pallas_src>
import functools

import jax
import jax.numpy as jnp
from jax.experimental import pallas as pl
from jax.experimental.pallas import tpu as pltpu

LANES = 128          # vreg lane width
_UNROLL_MAX = 16     # fully unroll the slice loop (Python loop) up to this many slices


def _round_up(a, b):
    return (a + b - 1) // b * b


def _channel_attention_kernel(x_ref, w1t_ref, w2t_ref, o_ref,
                              sum_acc, max_acc, *,
                              hw_total, t_hw, n_slices, need_mask):
    # x_ref:   (b_blk, C, t_hw)      input tile; t_hw is a multiple of 128
    # w1t_ref: (C, C_r_pad)          first 1x1-conv weight^T, zero-padded cols
    # w2t_ref: (C_r_pad, C_pad)      second 1x1-conv weight^T, zero-padded
    # o_ref:   (1, b_blk, C_pad)     lane-dense output slab
    # sum_acc, max_acc: (b_blk, C, 128) f32 partial accumulators (persist over s)
    s = pl.program_id(1)
    n_s = pl.num_programs(1)

    @pl.when(s == 0)
    def _init():
        sum_acc[...] = jnp.zeros_like(sum_acc)
        max_acc[...] = jnp.full(max_acc.shape, -jnp.inf, dtype=max_acc.dtype)

    def _accum_slices(masked):
        # Fold the tile into the 128-lane partial accumulators slice by slice:
        # pure VPU add/max; live footprint is a few vregs (no full-tile f32 temp).
        if masked:
            lane = jax.lax.broadcasted_iota(jnp.int32, (1, 1, LANES), 2)
            base = s * t_hw

        def one_slice(j, off):
            xs = x_ref[:, :, pl.ds(off, LANES)].astype(jnp.float32)
            if masked:
                valid = (base + j * LANES + lane) < hw_total
                xs_sum = jnp.where(valid, xs, 0.0)
                xs_max = jnp.where(valid, xs, -jnp.inf)
            else:
                xs_sum = xs
                xs_max = xs
            sum_acc[...] += xs_sum
            max_acc[...] = jnp.maximum(max_acc[...], xs_max)

        if n_slices <= _UNROLL_MAX:
            for j in range(n_slices):               # static offsets, unrolled
                one_slice(j, j * LANES)
        else:
            def body(j, carry):
                one_slice(j, pl.multiple_of(j * LANES, LANES))
                return carry
            jax.lax.fori_loop(0, n_slices, body, 0)

    if need_mask:
        # Only the last spatial tile may contain out-of-range lanes: keep the
        # steady-state path mask-free.
        @pl.when(s != n_s - 1)
        def _steady():
            _accum_slices(masked=False)

        @pl.when(s == n_s - 1)
        def _tail():
            _accum_slices(masked=True)
    else:
        _accum_slices(masked=False)

    @pl.when(s == n_s - 1)
    def _finalize():
        b_blk = sum_acc.shape[0]
        # Single cross-lane (XLU) reduction per batch block.
        avg = jnp.sum(sum_acc[...], axis=-1) * (1.0 / hw_total)     # (b_blk, C)
        mx = jnp.max(max_acc[...], axis=-1)                         # (b_blk, C)
        # Fused MLP: one matmul chain over the stacked avg/max rows.
        stacked = jnp.concatenate([avg, mx], axis=0)                # (2*b_blk, C)
        h = jnp.dot(stacked, w1t_ref[...],
                    preferred_element_type=jnp.float32)             # (2*b_blk, C_r_pad)
        h = jnp.maximum(h, 0.0)                                     # ReLU
        y = jnp.dot(h, w2t_ref[...],
                    preferred_element_type=jnp.float32)             # (2*b_blk, C_pad)
        out = jax.nn.sigmoid(y[:b_blk] + y[b_blk:])                 # (b_blk, C_pad)
        o_ref[0, :, :] = out.astype(o_ref.dtype)


def _choose_tiling(B, C, HW, itemsize):
    """Generation-aware block sizing."""
    try:
        vmem_cap = int(pltpu.get_tpu_info().vmem_capacity_bytes)
    except Exception:
        vmem_cap = 64 << 20  # conservative fallback, safe everywhere
    # Heuristic: v7x exposes 64 MiB VMEM per TensorCore and has 2 TCs per chip;
    # v5e/v6e expose 128 MiB and are single-TC.
    two_tc = vmem_cap <= (96 << 20)
    # HBM roofline saturates around a few-MiB tiles; keep the per-step x block
    # modest (extra margin on v7x's smaller VMEM), which also keeps the
    # double-buffered footprint small.
    budget = (8 << 20) if two_tc else (16 << 20)

    hw_pad = _round_up(HW, LANES)
    bytes_per_row = C * hw_pad * itemsize                 # one batch row of x
    acc_per_row = 2 * C * LANES * 4                       # sum+max scratch per row
    if bytes_per_row <= budget:
        t_hw = hw_pad
        b_blk = max(1, min(B, budget // (bytes_per_row + acc_per_row)))
        if two_tc and B >= 2:
            # Keep >= 2 batch blocks so megacore shards the parallel axis
            # across both TensorCores (never applied on single-TC v5e/v6e).
            b_blk = min(b_blk, pl.cdiv(B, 2))
    else:
        b_blk = 1
        t_hw = max(LANES, (budget // (C * itemsize)) // LANES * LANES)
        t_hw = min(t_hw, hw_pad)
        # TODO(synk): when two_tc and B == 1, split the spatial reduction over a
        # leading size-2 parallel axis (per-core partial sum/max + tiny epilogue)
        # so the second v7x TensorCore isn't idle.
    return b_blk, t_hw, vmem_cap


def channel_attention(x, w1, w2, *, block_batch=None, block_hw=None):
    """x: (B, C, H, W) float (f32 or bf16; accumulation is f32 in-kernel).
    w1: (C_r, C) = Conv2d(C, C_r, 1, bias=False).weight[:, :, 0, 0]
    w2: (C, C_r) = Conv2d(C_r, C, 1, bias=False).weight[:, :, 0, 0]
    returns sigmoid(mlp(avgpool(x)) + mlp(maxpool(x))) of shape (B, C, 1, 1)."""
    B, C, H, W = x.shape
    HW = H * W
    C_r = w1.shape[0]
    itemsize = jnp.dtype(x.dtype).itemsize

    b_blk, t_hw, vmem_cap = _choose_tiling(B, C, HW, itemsize)
    if block_batch is not None:
        b_blk = max(1, min(int(block_batch), B))
    if block_hw is not None:
        # Spatial tile must be a (nonzero) multiple of the 128 lane width.
        t_hw = min(_round_up(max(1, int(block_hw)), LANES), _round_up(HW, LANES))

    n_b = pl.cdiv(B, b_blk)
    n_s = pl.cdiv(HW, t_hw)
    n_slices = t_hw // LANES
    need_mask = (HW % t_hw) != 0

    # MXU/lane-friendly zero-padding of the (tiny) weights only; x is untouched.
    C_pad = _round_up(C, LANES)
    C_r_pad = _round_up(C_r, LANES)

    x_flat = x.reshape(B, C, HW)
    w1t = jnp.zeros((C, C_r_pad), jnp.float32).at[:, :C_r].set(
        w1.T.astype(jnp.float32))
    w2t = jnp.zeros((C_r_pad, C_pad), jnp.float32).at[:C_r, :C].set(
        w2.T.astype(jnp.float32))

    # Tight scoped-VMEM request: 2 x-buffers (double-buffered pipeline),
    # double-buffered weights/output, scratch, small slack.
    x_block_bytes = b_blk * C * t_hw * itemsize
    weight_bytes = (C * C_r_pad + C_r_pad * C_pad) * 4
    out_block_bytes = b_blk * C_pad * itemsize
    scratch_bytes = 2 * b_blk * C * LANES * 4
    vmem_limit = (2 * x_block_bytes + 2 * weight_bytes + 2 * out_block_bytes
                  + scratch_bytes + (4 << 20))
    vmem_limit = int(max(16 << 20, min(vmem_limit, vmem_cap)))

    kernel = functools.partial(_channel_attention_kernel,
                               hw_total=HW, t_hw=t_hw, n_slices=n_slices,
                               need_mask=need_mask)

    out = pl.pallas_call(
        kernel,
        out_shape=jax.ShapeDtypeStruct((n_b, b_blk, C_pad), x.dtype),
        grid_spec=pltpu.PrefetchScalarGridSpec(
            num_scalar_prefetch=0,
            grid=(n_b, n_s),                           # reduction (spatial) axis last
            in_specs=[
                pl.BlockSpec((b_blk, C, t_hw), lambda b, s: (b, 0, s)),
                pl.BlockSpec((C, C_r_pad), lambda b, s: (0, 0)),
                pl.BlockSpec((C_r_pad, C_pad), lambda b, s: (0, 0)),
            ],
            out_specs=pl.BlockSpec((1, b_blk, C_pad), lambda b, s: (b, 0, 0)),
            scratch_shapes=[
                pltpu.VMEM((b_blk, C, LANES), jnp.float32),   # 128-wide partial sums
                pltpu.VMEM((b_blk, C, LANES), jnp.float32),   # 128-wide partial maxes
            ],
        ),
        compiler_params=pltpu.CompilerParams(
            dimension_semantics=("parallel", "arbitrary"),
            vmem_limit_bytes=vmem_limit,
        ),
    )(x_flat, w1t, w2t)

    out = out.reshape(n_b * b_blk, C_pad)[:B, :C]
    return out.reshape(B, C, 1, 1).astype(x.dtype)


def _reference(x, w1, w2):
    # Pure-JAX reference of the PyTorch forward.
    avg = jnp.mean(x, axis=(2, 3))                   # (B, C)
    mx = jnp.max(x, axis=(2, 3))                     # (B, C)

    def mlp(v):
        h = jnp.maximum(v @ w1.T, 0.0)               # (B, C_r)
        return h @ w2.T                              # (B, C)

    out = jax.nn.sigmoid(mlp(avg) + mlp(mx))
    return out[:, :, None, None]


if __name__ == "__main__":
    B, C, H, W = 2, 64, 16, 16
    ratio = 16
    C_r = C // ratio

    key = jax.random.PRNGKey(0)
    kx, k1, k2 = jax.random.split(key, 3)
    x = jax.random.normal(kx, (B, C, H, W), dtype=jnp.float32)
    # Deterministic synthetic weights (shapes match nn.Conv2d(.., 1, bias=False)).
    w1 = jax.random.normal(k1, (C_r, C), dtype=jnp.float32) * 0.1   # C -> C//ratio
    w2 = jax.random.normal(k2, (C, C_r), dtype=jnp.float32) * 0.1   # C//ratio -> C

    out = channel_attention(x, w1, w2)
    out = jax.block_until_ready(out)
    ref = _reference(x, w1, w2)
    assert out.shape == (B, C, 1, 1)
    assert jnp.allclose(out, ref, atol=1e-5, rtol=1e-5), "mismatch vs reference"

    # Exercise the spatially-tiled reduction path (HW = 400 is not a multiple of
    # the 128-wide spatial tile -> last-tile masking) and batch blocking.
    x2 = jax.random.normal(jax.random.PRNGKey(1), (4, C, 20, 20), dtype=jnp.float32)
    out2 = channel_attention(x2, w1, w2, block_batch=2, block_hw=128)
    out2 = jax.block_until_ready(out2)
    ref2 = _reference(x2, w1, w2)
    assert out2.shape == (4, C, 1, 1)
    assert jnp.allclose(out2, ref2, atol=1e-5, rtol=1e-5), "mismatch (tiled path)"

    # Single-tile path with a non-128-multiple HW (t_hw rounded up, masked once).
    x3 = jax.random.normal(jax.random.PRNGKey(2), (3, C, 20, 20), dtype=jnp.float32)
    out3 = jax.block_until_ready(channel_attention(x3, w1, w2))
    ref3 = _reference(x3, w1, w2)
    assert jnp.allclose(out3, ref3, atol=1e-5, rtol=1e-5), "mismatch (masked single tile)"

    print("KERNEL_OK")
</pallas_src>

<mosaic_0001>
module attributes {stable_mosaic.version = 11 : i64} {
  func.func @_channel_attention_kernel(%arg0: i32, %arg1: i32, %arg2: memref<1x64x256xf32, #tpu.memory_space<vmem>>, %arg3: memref<64x128xf32, #tpu.memory_space<vmem>>, %arg4: memref<128x128xf32, #tpu.memory_space<vmem>>, %arg5: memref<1x1x128xf32, #tpu.memory_space<vmem>>, %arg6: memref<1x64x128xf32, #tpu.memory_space<vmem>>, %arg7: memref<1x64x128xf32, #tpu.memory_space<vmem>>) attributes {dimension_semantics = [#tpu.dimension_semantics<parallel>, #tpu.dimension_semantics<arbitrary>], iteration_bounds = array<i64: 2, 1>, scalar_prefetch = 0 : i64, scratch_operands = 2 : i64, tpu.core_type = #tpu.core_type<tc>, window_params = [{transform_indices = @transform_0, window_bounds = array<i64: 1, 64, 256>}, {pipeline_mode = #tpu.pipeline_mode<synchronous>, transform_indices = @transform_1, window_bounds = array<i64: 64, 128>}, {pipeline_mode = #tpu.pipeline_mode<synchronous>, transform_indices = @transform_2, window_bounds = array<i64: 128, 128>}, {transform_indices = @transform_3, window_bounds = array<i64: 1, 1, 128>}]} {
    %c0_i32 = arith.constant 0 : i32
    %0 = arith.cmpi eq, %arg1, %c0_i32 : i32
    %1 = arith.extui %0 : i1 to i32
    %c0_i32_0 = arith.constant 0 : i32
    %2 = arith.cmpi ne, %1, %c0_i32_0 : i32
    scf.if %2 {
      %cst = arith.constant 0.000000e+00 : f32
      %20 = vector.broadcast %cst : f32 to vector<1x64x128xf32>
      %c0_31 = arith.constant 0 : index
      %c0_32 = arith.constant 0 : index
      %c0_33 = arith.constant 0 : index
      %21 = vector.load %arg6[%c0_31, %c0_32, %c0_33] : memref<1x64x128xf32, #tpu.memory_space<vmem>>, vector<1x64x128xf32>
      tpu.vector_store %arg6[%c0_31, %c0_32, %c0_33], %20 {strides = array<i32>} : memref<1x64x128xf32, #tpu.memory_space<vmem>>, vector<1x64x128xf32>,
      %cst_34 = arith.constant 0xFF800000 : f32
      %22 = vector.broadcast %cst_34 : f32 to vector<1x64x128xf32>
      %c0_35 = arith.constant 0 : index
      %c0_36 = arith.constant 0 : index
      %c0_37 = arith.constant 0 : index
      %23 = vector.load %arg7[%c0_35, %c0_36, %c0_37] : memref<1x64x128xf32, #tpu.memory_space<vmem>>, vector<1x64x128xf32>
      tpu.vector_store %arg7[%c0_35, %c0_36, %c0_37], %22 {strides = array<i32>} : memref<1x64x128xf32, #tpu.memory_space<vmem>>, vector<1x64x128xf32>,
    } else {
    }
    %c0 = arith.constant 0 : index
    %c0_1 = arith.constant 0 : index
    %c0_2 = arith.constant 0 : index
    %3 = vector.load %arg2[%c0, %c0_1, %c0_2] : memref<1x64x256xf32, #tpu.memory_space<vmem>>, vector<1x64x128xf32>
    %c0_3 = arith.constant 0 : index
    %c0_4 = arith.constant 0 : index
    %c0_5 = arith.constant 0 : index
    %4 = vector.load %arg6[%c0_3, %c0_4, %c0_5] : memref<1x64x128xf32, #tpu.memory_space<vmem>>, vector<1x64x128xf32>
    %5 = arith.addf %4, %3 : vector<1x64x128xf32>
    %c0_6 = arith.constant 0 : index
    %c0_7 = arith.constant 0 : index
    %c0_8 = arith.constant 0 : index
    %6 = vector.load %arg6[%c0_6, %c0_7, %c0_8] : memref<1x64x128xf32, #tpu.memory_space<vmem>>, vector<1x64x128xf32>
    tpu.vector_store %arg6[%c0_6, %c0_7, %c0_8], %5 {strides = array<i32>} : memref<1x64x128xf32, #tpu.memory_space<vmem>>, vector<1x64x128xf32>,
    %c0_9 = arith.constant 0 : index
    %c0_10 = arith.constant 0 : index
    %c0_11 = arith.constant 0 : index
    %7 = vector.load %arg7[%c0_9, %c0_10, %c0_11] : memref<1x64x128xf32, #tpu.memory_space<vmem>>, vector<1x64x128xf32>
    %8 = arith.maximumf %7, %3 : vector<1x64x128xf32>
    %c0_12 = arith.constant 0 : index
    %c0_13 = arith.constant 0 : index
    %c0_14 = arith.constant 0 : index
    %9 = vector.load %arg7[%c0_12, %c0_13, %c0_14] : memref<1x64x128xf32, #tpu.memory_space<vmem>>, vector<1x64x128xf32>
    tpu.vector_store %arg7[%c0_12, %c0_13, %c0_14], %8 {strides = array<i32>} : memref<1x64x128xf32, #tpu.memory_space<vmem>>, vector<1x64x128xf32>,
    %c0_15 = arith.constant 0 : index
    %c0_16 = arith.constant 0 : index
    %c128 = arith.constant 128 : index
    %10 = vector.load %arg2[%c0_15, %c0_16, %c128] : memref<1x64x256xf32, #tpu.memory_space<vmem>>, vector<1x64x128xf32>
    %c0_17 = arith.constant 0 : index
    %c0_18 = arith.constant 0 : index
    %c0_19 = arith.constant 0 : index
    %11 = vector.load %arg6[%c0_17, %c0_18, %c0_19] : memref<1x64x128xf32, #tpu.memory_space<vmem>>, vector<1x64x128xf32>
    %12 = arith.addf %11, %10 : vector<1x64x128xf32>
    %c0_20 = arith.constant 0 : index
    %c0_21 = arith.constant 0 : index
    %c0_22 = arith.constant 0 : index
    %13 = vector.load %arg6[%c0_20, %c0_21, %c0_22] : memref<1x64x128xf32, #tpu.memory_space<vmem>>, vector<1x64x128xf32>
    tpu.vector_store %arg6[%c0_20, %c0_21, %c0_22], %12 {strides = array<i32>} : memref<1x64x128xf32, #tpu.memory_space<vmem>>, vector<1x64x128xf32>,
    %c0_23 = arith.constant 0 : index
    %c0_24 = arith.constant 0 : index
    %c0_25 = arith.constant 0 : index
    %14 = vector.load %arg7[%c0_23, %c0_24, %c0_25] : memref<1x64x128xf32, #tpu.memory_space<vmem>>, vector<1x64x128xf32>
    %15 = arith.maximumf %14, %10 : vector<1x64x128xf32>
    %c0_26 = arith.constant 0 : index
    %c0_27 = arith.constant 0 : index
    %c0_28 = arith.constant 0 : index
    %16 = vector.load %arg7[%c0_26, %c0_27, %c0_28] : memref<1x64x128xf32, #tpu.memory_space<vmem>>, vector<1x64x128xf32>
    tpu.vector_store %arg7[%c0_26, %c0_27, %c0_28], %15 {strides = array<i32>} : memref<1x64x128xf32, #tpu.memory_space<vmem>>, vector<1x64x128xf32>,
    %c0_i32_29 = arith.constant 0 : i32
    %17 = arith.cmpi eq, %arg1, %c0_i32_29 : i32
    %18 = arith.extui %17 : i1 to i32
    %c0_i32_30 = arith.constant 0 : i32
    %19 = arith.cmpi ne, %18, %c0_i32_30 : i32
    scf.if %19 {
      %c0_31 = arith.constant 0 : index
      %c0_32 = arith.constant 0 : index
      %c0_33 = arith.constant 0 : index
      %20 = vector.load %arg6[%c0_31, %c0_32, %c0_33] : memref<1x64x128xf32, #tpu.memory_space<vmem>>, vector<1x64x128xf32>
      %cst = arith.constant dense<0.000000e+00> : vector<1x64xf32>
      %21 = vector.multi_reduction <add>, %20, %cst [2] : vector<1x64x128xf32> to vector<1x64xf32>
      %cst_34 = arith.constant 3.906250e-03 : f32
      %22 = vector.broadcast %cst_34 : f32 to vector<1x64xf32>
      %23 = arith.mulf %21, %22 : vector<1x64xf32>
      %c0_35 = arith.constant 0 : index
      %c0_36 = arith.constant 0 : index
      %c0_37 = arith.constant 0 : index
      %24 = vector.load %arg7[%c0_35, %c0_36, %c0_37] : memref<1x64x128xf32, #tpu.memory_space<vmem>>, vector<1x64x128xf32>
      %cst_38 = arith.constant dense<0xFF800000> : vector<1x64xf32>
      %25 = vector.multi_reduction <maximumf>, %24, %cst_38 [2] : vector<1x64x128xf32> to vector<1x64xf32>
      %26 = tpu.concatenate %23, %25 in 0 : vector<1x64xf32>, vector<1x64xf32> -> vector<2x64xf32>
      %c0_39 = arith.constant 0 : index
      %c0_40 = arith.constant 0 : index
      %27 = vector.load %arg3[%c0_39, %c0_40] : memref<64x128xf32, #tpu.memory_space<vmem>>, vector<64x128xf32>
      %cst_41 = arith.constant dense<0.000000e+00> : vector<2x128xf32>
      %28 = tpu.matmul %26, %27, %cst_41 {dimension_numbers = #tpu.dot_dimension_numbers<[1], [0], [0], [1], [0, 0, 1, 1], [], []>} : vector<2x64xf32>, vector<64x128xf32>, vector<2x128xf32> -> vector<2x128xf32>
      %cst_42 = arith.constant 0.000000e+00 : f32
      %29 = vector.broadcast %cst_42 : f32 to vector<2x128xf32>
      %30 = arith.maximumf %28, %29 : vector<2x128xf32>
      %c0_43 = arith.constant 0 : index
      %c0_44 = arith.constant 0 : index
      %31 = vector.load %arg4[%c0_43, %c0_44] : memref<128x128xf32, #tpu.memory_space<vmem>>, vector<128x128xf32>
      %cst_45 = arith.constant dense<0.000000e+00> : vector<2x128xf32>
      %32 = tpu.matmul %30, %31, %cst_45 {dimension_numbers = #tpu.dot_dimension_numbers<[1], [0], [0], [1], [0, 0, 1, 1], [], []>} : vector<2x128xf32>, vector<128x128xf32>, vector<2x128xf32> -> vector<2x128xf32>
      %33 = vector.extract_strided_slice %32 {offsets = [0, 0], sizes = [1, 128], strides = [1, 1]} : vector<2x128xf32> to vector<1x128xf32>
      %34 = vector.extract_strided_slice %32 {offsets = [1, 0], sizes = [1, 128], strides = [1, 1]} : vector<2x128xf32> to vector<1x128xf32>
      %35 = arith.addf %33, %34 : vector<1x128xf32>
      %36 = arith.negf %35 : vector<1x128xf32>
      %37 = math.exp %36 : vector<1x128xf32>
      %cst_46 = arith.constant 1.000000e+00 : f32
      %38 = vector.broadcast %cst_46 : f32 to vector<1x128xf32>
      %39 = arith.addf %38, %37 : vector<1x128xf32>
      %40 = arith.divf %38, %39 : vector<1x128xf32>
      %c0_47 = arith.constant 0 : index
      %c0_48 = arith.constant 0 : index
      %c0_49 = arith.constant 0 : index
      %41 = vector.load %arg5[%c0_47, %c0_48, %c0_49] : memref<1x1x128xf32, #tpu.memory_space<vmem>>, vector<1x1x128xf32>
      %42 = vector.shape_cast %41 : vector<1x1x128xf32> to vector<1x128xf32>
      %43 = vector.shape_cast %40 : vector<1x128xf32> to vector<1x1x128xf32>
      tpu.vector_store %arg5[%c0_47, %c0_48, %c0_49], %43 {strides = array<i32>} : memref<1x1x128xf32, #tpu.memory_space<vmem>>, vector<1x1x128xf32>,
    } else {
    }
    return
  }
  func.func @transform_0(%arg0: i32, %arg1: i32) -> (i32, i32, i32) {
    %c0_i32 = arith.constant 0 : i32
    %c0_i32_0 = arith.constant 0 : i32
    return %arg0, %c0_i32, %arg1 : i32, i32, i32
  }
  func.func @transform_1(%arg0: i32, %arg1: i32) -> (i32, i32) {
    %c0_i32 = arith.constant 0 : i32
    %c0_i32_0 = arith.constant 0 : i32
    %c0_i32_1 = arith.constant 0 : i32
    return %c0_i32, %c0_i32_0 : i32, i32
  }
  func.func @transform_2(%arg0: i32, %arg1: i32) -> (i32, i32) {
    %c0_i32 = arith.constant 0 : i32
    %c0_i32_0 = arith.constant 0 : i32
    %c0_i32_1 = arith.constant 0 : i32
    return %c0_i32, %c0_i32_0 : i32, i32
  }
  func.func @transform_3(%arg0: i32, %arg1: i32) -> (i32, i32, i32) {
    %c0_i32 = arith.constant 0 : i32
    %c0_i32_0 = arith.constant 0 : i32
    %c0_i32_1 = arith.constant 0 : i32
    return %arg0, %c0_i32, %c0_i32_0 : i32, i32, i32
  }
}

</mosaic_0001>

<llo_original>
// kernel: tpu_custom_call.1
$region0: #{tpu_custom_call.1}
  #allocation0 [shape = 'u32[]', space=smem, size = 0x4, offset = 0x4, fixed_abs, tag = 'smem constant byte address 0x4 - core index']
  #allocation1 [shape = 'u32[144,128]{1,0:T(1,128)}', space=vmem, size = 0x12000, scoped, tag = 'internal scratch']
  #allocation2 [shape = 'f32[1,64,128]{2,1,0:T(8,128)}', space=vmem, size = 0x8000, scoped, tag = 'scratch operand']
  #allocation3 [shape = 'f32[1,64,128]{2,1,0:T(8,128)}', space=vmem, size = 0x8000, scoped, tag = 'scratch operand']
  %s0 = inlined_call_operand.hbm [shape: f32[2,64,256], index: 0, kind: input, shape index: {}]
  %s1 = inlined_call_operand.hbm [shape: f32[64,128], index: 1, kind: input, shape index: {}]
  %s2 = inlined_call_operand.hbm [shape: f32[128,128], index: 2, kind: input, shape index: {}]
  %s3 = inlined_call_operand.hbm [shape: f32[2,1,128], index: 3, kind: output, shape index: {}]
  %s4 = sld [smem:[#allocation0]]
  $region65: #{tpu_custom_call.1} parent=0
    _
  %s6 = ssub.s32 1, %s4
  %s7 = scalar_select 0, %s6, %s4
  $region1: #{tpu_custom_call.1} parent=0
    #allocation4 [shape = 'u8[131072]{0}', space=vmem, size = 0x20000, scoped, tag = 'input window, operand 0']
    #allocation5 [shape = 's32[2]{0}', space=sflag, size = 0x8, scoped, tag = 'scoped memory for tpu_custom_call.1']
    #allocation6 [shape = 's32[2]{0}', space=sflag, size = 0x8, scoped, tag = 'scoped memory for tpu_custom_call.1']
    #allocation7 [shape = 'u8[32768]{0}', space=vmem, size = 0x8000, scoped, tag = 'input window, operand 1, single buffered']
    #allocation8 [shape = 's32[1]{0}', space=sflag, size = 0x4, scoped, tag = 'scoped memory for tpu_custom_call.1']
    #allocation9 [shape = 'u8[65536]{0}', space=vmem, size = 0x10000, scoped, tag = 'input window, operand 2, single buffered']
    #allocation10 [shape = 'u8[1024]{0}', space=vmem, size = 0x400, scoped, tag = 'output window, operand 0']
    %8 = vsyncpa [#allocation5], 0
    %s9 = scalar_lea.sflag [#allocation5], 1
    %10 = vsyncpa %s9, 0
    %11 = vsyncpa [#allocation8], 0
    %12 = vsyncpa [#allocation6], 0
    %s13 = scalar_lea.sflag [#allocation6], 1
    %14 = vsyncpa %s13, 0
    loop: start=0, step=1, limit=4
    $region2: #{tpu_custom_call.1} parent=1 // loop_pre_header
      _
    $region3: #{tpu_custom_call.1} parent=1 // loop_header
      %s16 = sphi 0, %s20
      %p17 = scmp.ge.s32.totalorder %s16, 4
      %s23 = sphi 0, %s35
      %s24 = sphi 0, %s31
      %s25 = sphi 0, %s23
      %s26 = sphi 0, %s24
      %s27 = sphi 0, %s25
      %s28 = sphi 0, %s26
      %s40 = sphi 0, %s42
      %s43 = sphi 0, %s40
      %s44 = sphi 0, %s43
      %s60 = sphi 0, %s44
      %s64 = sphi 0, %s64
      %s66 = sphi 0, %s64
      %s67 = sphi 0, %s66
      %s81 = sphi 0, %s67
      %s85 = sphi 0, %s85
      %s87 = sphi 0, %s85
      %s88 = sphi 0, %s87
      %s102 = sphi 0, %s88
      %s108 = sphi 0, %s110
      %s111 = sphi 0, %s108
      %s112 = sphi 0, %s111
      %s128 = sphi 0, %s112
    $region4: #{tpu_custom_call.1} parent=1 // loop_header_branch
      %19 = sbr.rel (%p17) target = $region8
    $region5: #{tpu_custom_call.1} parent=1 // loop_body
      %s21 = ssub.s32 %s16, 1
      %s22 = ssub.s32 %s16, 2
      %s29 = sadd.s32 1, %s24
      %p30 = scmp.ge.s32.totalorder %s29, 1
      %s31 = scalar_select %p30, 0, %s29
      %s32 = sadd.s32 1, %s23
      %s33 = scalar_select %p30, %s32, %s23
      %p34 = scmp.ge.s32.totalorder %s33, 2
      %s35 = scalar_select %p34, 0, %s33
      %s36 = ssub.s32 %s23, %s35
      %s37 = ssub.s32 %s24, %s31
      %s38 = sor.u32 %s36, %s37
      %p39 = scmp.eq.s32.totalorder %s38, 0
      %s41 = sadd.s32 %s40, 1
      %s42 = scalar_select %p39, %s40, %s41
      %p45 = pneg %p39
      %p46 = scmp.eq.s32.totalorder %s16, 1
      %p47 = por %p45, %p46
      %p48 = scmp.ne.s32.totalorder %s40, %s43
      %p49 = scmp.eq.s32.totalorder %s16, 0
      %p50 = por %p48, %p49
      %p51 = scmp.ne.s32.totalorder %s40, %s43
      %p52 = scmp.eq.s32.totalorder %s21, 1
      %p53 = por %p51, %p52
      %p54 = scmp.ne.s32.totalorder %s43, %s44
      %p55 = scmp.eq.s32.totalorder %s21, 0
      %p56 = por %p54, %p55
      %p57 = scmp.ne.s32.totalorder %s43, %s44
      %p58 = scmp.eq.s32.totalorder %s22, 1
      %p59 = por %p57, %p58
      %p61 = scmp.ne.s32.totalorder %s44, %s60
      %p62 = scmp.eq.s32.totalorder %s22, 0
      %p63 = por %p61, %p62
      %s65 = sadd.s32 %s64, 1
      %p68 = scmp.eq.s32.totalorder %s16, 1
      %p69 = scmp.ne.s32.totalorder %s64, %s66
      %p70 = scmp.eq.s32.totalorder %s16, 0
      %p71 = por %p69, %p70
      %p72 = scmp.ne.s32.totalorder %s64, %s66
      %p73 = scmp.eq.s32.totalorder %s21, 1
      %p74 = por %p72, %p73
      %p75 = scmp.ne.s32.totalorder %s66, %s67
      %p76 = scmp.eq.s32.totalorder %s21, 0
      %p77 = por %p75, %p76
      %p78 = scmp.ne.s32.totalorder %s66, %s67
      %p79 = scmp.eq.s32.totalorder %s22, 1
      %p80 = por %p78, %p79
      %p82 = scmp.ne.s32.totalorder %s67, %s81
      %p83 = scmp.eq.s32.totalorder %s22, 0
      %p84 = por %p82, %p83
      %s86 = sadd.s32 %s85, 1
      %p89 = scmp.eq.s32.totalorder %s16, 1
      %p90 = scmp.ne.s32.totalorder %s85, %s87
      %p91 = scmp.eq.s32.totalorder %s16, 0
      %p92 = por %p90, %p91
      %p93 = scmp.ne.s32.totalorder %s85, %s87
      %p94 = scmp.eq.s32.totalorder %s21, 1
      %p95 = por %p93, %p94
      %p96 = scmp.ne.s32.totalorder %s87, %s88
      %p97 = scmp.eq.s32.totalorder %s21, 0
      %p98 = por %p96, %p97
      %p99 = scmp.ne.s32.totalorder %s87, %s88
      %p100 = scmp.eq.s32.totalorder %s22, 1
      %p101 = por %p99, %p100
      %p103 = scmp.ne.s32.totalorder %s88, %s102
      %p104 = scmp.eq.s32.totalorder %s22, 0
      %p105 = por %p103, %p104
      %s106 = ssub.s32 %s23, %s35
      %p107 = scmp.eq.s32.totalorder %s106, 0
      %s109 = sadd.s32 %s108, 1
      %s110 = scalar_select %p107, %s108, %s109
      %p113 = pneg %p107
      %p114 = scmp.eq.s32.totalorder %s16, 1
      %p115 = por %p113, %p114
      %p116 = scmp.ne.s32.totalorder %s108, %s111
      %p117 = scmp.eq.s32.totalorder %s16, 0
      %p118 = por %p116, %p117
      %p119 = scmp.ne.s32.totalorder %s108, %s111
      %p120 = scmp.eq.s32.totalorder %s21, 1
      %p121 = por %p119, %p120
      %p122 = scmp.ne.s32.totalorder %s111, %s112
      %p123 = scmp.eq.s32.totalorder %s21, 0
      %p124 = por %p122, %p123
      %p125 = scmp.ne.s32.totalorder %s111, %s112
      %p126 = scmp.eq.s32.totalorder %s22, 1
      %p127 = por %p125, %p126
      %p129 = scmp.ne.s32.totalorder %s112, %s128
      %p130 = scmp.eq.s32.totalorder %s22, 0
      %p131 = por %p129, %p130
      %p132 = scmp.le.s32.totalorder 1, %s16
      %p133 = scmp.lt.s32.totalorder %s16, 3
      %p134 = pnand %p132, %p133
      %p135 = pneg %p134
      // Predicated region
      $region9: #{tpu_custom_call.1} parent=5 // pred_check
        _
      $region10: #{tpu_custom_call.1} parent=5 // pred_check_branch
        %137 = sbr.rel (%p134) target = $region12
      $region11: #{tpu_custom_call.1} parent=5 // pred_region
        %s138 = ssub.s32 %s16, 1
        // Predicated region
        $region13: #{tpu_custom_call.1} parent=11 // pred_check
          %p139 = pneg %p77
        $region14: #{tpu_custom_call.1} parent=11 // pred_check_branch
          %141 = sbr.rel (%p139) target = $region16
        $region15: #{tpu_custom_call.1} parent=11 // pred_region
          %s143 = ssub.s32 1024, 1024
          %144 = vsyncadd [#allocation8], %s143
          %s145 = sshll.u32 [#allocation7], 4
          %s146 = int_to_ptr.vmem [resolvable:$true] %s145
          %151 = dma.hbm_to_vmem [thread:$0]  %s1, 1024, %s146, [#allocation8], 128, 128, 8
        $region16: #{tpu_custom_call.1} parent=11 // pred_fallthru
          _
        // Predicated region
        $region17: #{tpu_custom_call.1} parent=11 // pred_check
          %p152 = pneg %p98
        $region18: #{tpu_custom_call.1} parent=11 // pred_check_branch
          %154 = sbr.rel (%p152) target = $region20
        $region19: #{tpu_custom_call.1} parent=11 // pred_region
          %s156 = ssub.s32 2048, 2048
          %157 = vsyncadd [#allocation8], %s156
          %s158 = sshll.u32 [#allocation9], 4
          %s159 = int_to_ptr.vmem [resolvable:$true] %s158
          %164 = dma.hbm_to_vmem [thread:$0]  %s2, 2048, %s159, [#allocation8], 128, 128, 8
        $region20: #{tpu_custom_call.1} parent=11 // pred_fallthru
          _
      $region12: #{tpu_custom_call.1} parent=5 // pred_fallthru
        _
      %p165 = scmp.lt.s32.totalorder %s16, 2
      // Predicated region
      $region21: #{tpu_custom_call.1} parent=5 // pred_check
        %p166 = pneg %p165
      $region22: #{tpu_custom_call.1} parent=5 // pred_check_branch
        %168 = sbr.rel (%p166) target = $region24
      $region23: #{tpu_custom_call.1} parent=5 // pred_region
        // Predicated region
        $region25: #{tpu_custom_call.1} parent=23 // pred_check
          %p169 = pneg %p50
        $region26: #{tpu_custom_call.1} parent=23 // pred_check_branch
          %171 = sbr.rel (%p169) target = $region28
        $region27: #{tpu_custom_call.1} parent=23 // pred_region
          %s172 = sand.u32 %s40, 1
          %s173 = scalar_lea.sflag [#allocation5], %s172
          %s174 = sand.u32 %s40, 1
          %s175 = smul.addr %s174, 128
          %s176 = scalar_lea.vmem [#allocation4], %s175
          %s177 = smul.u32 2, %s24
          %s179 = ssub.s32 2048, 2048
          %180 = vsyncadd %s173, %s179
          %s181 = smul.addr %s23, 16
          %s182 = sadd.s32 %s177, %s181
          %s183 = smul.addr %s182, 128
          %s184 = scalar_lea.hbm %s0, %s183
          %s185 = sshll.u32 %s176, 4
          %s186 = int_to_ptr.vmem [resolvable:$true] %s185
          %191 = dma.hbm_to_vmem [thread:$0]  %s184, 2048, %s186, %s173, 256, 256, 16
        $region28: #{tpu_custom_call.1} parent=23 // pred_fallthru
          _
      $region24: #{tpu_custom_call.1} parent=5 // pred_fallthru
        _
      %p192 = scmp.le.s32.totalorder 1, %s16
      %p193 = scmp.lt.s32.totalorder %s16, 3
      %p194 = pnand %p192, %p193
      %p195 = pneg %p194
      // Predicated region
      $region29: #{tpu_custom_call.1} parent=5 // pred_check
        _
      $region30: #{tpu_custom_call.1} parent=5 // pred_check_branch
        %197 = sbr.rel (%p194) target = $region32
      $region31: #{tpu_custom_call.1} parent=5 // pred_region
        %s198 = ssub.s32 %s16, 1
        %s199 = sand.u32 %s43, 1
        %s200 = scalar_lea.sflag [#allocation5], %s199
        %s201 = sand.u32 %s43, 1
        %s202 = smul.addr %s201, 128
        %s203 = scalar_lea.vmem [#allocation4], %s202
        // Predicated region
        $region33: #{tpu_custom_call.1} parent=31 // pred_check
          %p204 = pneg %p56
        $region34: #{tpu_custom_call.1} parent=31 // pred_check_branch
          %206 = sbr.rel (%p204) target = $region36
        $region35: #{tpu_custom_call.1} parent=31 // pred_region
          %207 = dma.done %s200, 2048
        $region36: #{tpu_custom_call.1} parent=31 // pred_fallthru
          _
        // Predicated region
        $region37: #{tpu_custom_call.1} parent=31 // pred_check
          %p208 = pneg %p77
        $region38: #{tpu_custom_call.1} parent=31 // pred_check_branch
          %210 = sbr.rel (%p208) target = $region40
        $region39: #{tpu_custom_call.1} parent=31 // pred_region
          %211 = dma.done [#allocation8], 1024
        $region40: #{tpu_custom_call.1} parent=31 // pred_fallthru
          _
        // Predicated region
        $region41: #{tpu_custom_call.1} parent=31 // pred_check
          %p212 = pneg %p98
        $region42: #{tpu_custom_call.1} parent=31 // pred_check_branch
          %214 = sbr.rel (%p212) target = $region44
        $region43: #{tpu_custom_call.1} parent=31 // pred_region
          %215 = dma.done [#allocation8], 2048
        $region44: #{tpu_custom_call.1} parent=31 // pred_fallthru
          _
        %s216 = sand.u32 %s43, 1
        %s217 = scalar_lea.sflag [#allocation5], %s216
        %s218 = sand.u32 %s43, 1
        %s219 = smul.addr %s218, 128
        %s220 = scalar_lea.vmem [#allocation4], %s219
        %p221 = pneg %p56
        %p222 = pneg %p53
        %p223 = pneg %p77
        %p224 = pneg %p74
        %p225 = pneg %p98
        %p226 = pneg %p95
        %p227 = pneg %p124
        %p228 = pneg %p121
        %s229 = sand.u32 %s111, 1
        %s230 = scalar_lea.sflag [#allocation6], %s229
        %s231 = sand.u32 %s111, 1
        %s232 = scalar_lea.vmem [#allocation10], %s231
        %s233 = smul.u32 2, %s26
        %p234 = scmp.eq.s32.totalorder %s26, 0
        // Predicated region
        $region45: #{tpu_custom_call.1} parent=31 // pred_check
          %p235 = pneg %p234
        $region46: #{tpu_custom_call.1} parent=31 // pred_check_branch
          %237 = sbr.rel (%p235) target = $region48
        $region47: #{tpu_custom_call.1} parent=31 // pred_region
          %238 = vst [vmem:[#allocation2] sm:$0xff] 0.0
          %239 = vst [vmem:[#allocation2 + $0x8] sm:$0xff] 0.0
          %240 = vst [vmem:[#allocation2 + $0x10] sm:$0xff] 0.0
          %241 = vst [vmem:[#allocation2 + $0x18] sm:$0xff] 0.0
          %242 = vst [vmem:[#allocation2 + $0x20] sm:$0xff] 0.0
          %243 = vst [vmem:[#allocation2 + $0x28] sm:$0xff] 0.0
          %244 = vst [vmem:[#allocation2 + $0x30] sm:$0xff] 0.0
          %245 = vst [vmem:[#allocation2 + $0x38] sm:$0xff] 0.0
          %246 = vst [vmem:[#allocation3] sm:$0xff] -inf
          %247 = vst [vmem:[#allocation3 + $0x8] sm:$0xff] -inf
          %248 = vst [vmem:[#allocation3 + $0x10] sm:$0xff] -inf
          %249 = vst [vmem:[#allocation3 + $0x18] sm:$0xff] -inf
          %250 = vst [vmem:[#allocation3 + $0x20] sm:$0xff] -inf
          %251 = vst [vmem:[#allocation3 + $0x28] sm:$0xff] -inf
          %252 = vst [vmem:[#allocation3 + $0x30] sm:$0xff] -inf
          %253 = vst [vmem:[#allocation3 + $0x38] sm:$0xff] -inf
        $region48: #{tpu_custom_call.1} parent=31 // pred_fallthru
          _
        %v254 = vld [vmem:[%s203] sm:$0xff]
        %v255 = vld [vmem:[%s203 + $0x10] sm:$0xff]
        %v256 = vld [vmem:[%s203 + $0x20] sm:$0xff]
        %v257 = vld [vmem:[%s203 + $0x30] sm:$0xff]
        %v258 = vld [vmem:[%s203 + $0x40] sm:$0xff]
        %v259 = vld [vmem:[%s203 + $0x50] sm:$0xff]
        %v260 = vld [vmem:[%s203 + $0x60] sm:$0xff]
        %v261 = vld [vmem:[%s203 + $0x70] sm:$0xff]
        %v262 = vld [vmem:[#allocation2] sm:$0xff]
        %v263 = vld [vmem:[#allocation2 + $0x8] sm:$0xff]
        %v264 = vld [vmem:[#allocation2 + $0x10] sm:$0xff]
        %v265 = vld [vmem:[#allocation2 + $0x18] sm:$0xff]
        %v266 = vld [vmem:[#allocation2 + $0x20] sm:$0xff]
        %v267 = vld [vmem:[#allocation2 + $0x28] sm:$0xff]
        %v268 = vld [vmem:[#allocation2 + $0x30] sm:$0xff]
        %v269 = vld [vmem:[#allocation2 + $0x38] sm:$0xff]
        %v270 = vadd.f32 %v262, %v254
        %v271 = vadd.f32 %v263, %v255
        %v272 = vadd.f32 %v264, %v256
        %v273 = vadd.f32 %v265, %v257
        %v274 = vadd.f32 %v266, %v258
        %v275 = vadd.f32 %v267, %v259
        %v276 = vadd.f32 %v268, %v260
        %v277 = vadd.f32 %v269, %v261
        %278 = vst [vmem:[#allocation2] sm:$0xff] %v270
        %279 = vst [vmem:[#allocation2 + $0x8] sm:$0xff] %v271
        %280 = vst [vmem:[#allocation2 + $0x10] sm:$0xff] %v272
        %281 = vst [vmem:[#allocation2 + $0x18] sm:$0xff] %v273
        %282 = vst [vmem:[#allocation2 + $0x20] sm:$0xff] %v274
        %283 = vst [vmem:[#allocation2 + $0x28] sm:$0xff] %v275
        %284 = vst [vmem:[#allocation2 + $0x30] sm:$0xff] %v276
        %285 = vst [vmem:[#allocation2 + $0x38] sm:$0xff] %v277
        %v286 = vld [vmem:[#allocation3] sm:$0xff]
        %v287 = vld [vmem:[#allocation3 + $0x8] sm:$0xff]
        %v288 = vld [vmem:[#allocation3 + $0x10] sm:$0xff]
        %v289 = vld [vmem:[#allocation3 + $0x18] sm:$0xff]
        %v290 = vld [vmem:[#allocation3 + $0x20] sm:$0xff]
        %v291 = vld [vmem:[#allocation3 + $0x28] sm:$0xff]
        %v292 = vld [vmem:[#allocation3 + $0x30] sm:$0xff]
        %v293 = vld [vmem:[#allocation3 + $0x38] sm:$0xff]
        %v294 = vmax.f32 %v286, %v254
        %v295 = vmax.f32 %v287, %v255
        %v296 = vmax.f32 %v288, %v256
        %v297 = vmax.f32 %v289, %v257
        %v298 = vmax.f32 %v290, %v258
        %v299 = vmax.f32 %v291, %v259
        %v300 = vmax.f32 %v292, %v260
        %v301 = vmax.f32 %v293, %v261
        %302 = vst [vmem:[#allocation3] sm:$0xff] %v294
        %303 = vst [vmem:[#allocation3 + $0x8] sm:$0xff] %v295
        %304 = vst [vmem:[#allocation3 + $0x10] sm:$0xff] %v296
        %305 = vst [vmem:[#allocation3 + $0x18] sm:$0xff] %v297
        %306 = vst [vmem:[#allocation3 + $0x20] sm:$0xff] %v298
        %307 = vst [vmem:[#allocation3 + $0x28] sm:$0xff] %v299
        %308 = vst [vmem:[#allocation3 + $0x30] sm:$0xff] %v300
        %309 = vst [vmem:[#allocation3 + $0x38] sm:$0xff] %v301
        %v310 = vld [vmem:[%s203 + $0x8] sm:$0xff]
        %v311 = vld [vmem:[%s203 + $0x18] sm:$0xff]
        %v312 = vld [vmem:[%s203 + $0x28] sm:$0xff]
        %v313 = vld [vmem:[%s203 + $0x38] sm:$0xff]
        %v314 = vld [vmem:[%s203 + $0x48] sm:$0xff]
        %v315 = vld [vmem:[%s203 + $0x58] sm:$0xff]
        %v316 = vld [vmem:[%s203 + $0x68] sm:$0xff]
        %v317 = vld [vmem:[%s203 + $0x78] sm:$0xff]
        %v318 = vld [vmem:[#allocation2] sm:$0xff]
        %v319 = vld [vmem:[#allocation2 + $0x8] sm:$0xff]
        %v320 = vld [vmem:[#allocation2 + $0x10] sm:$0xff]
        %v321 = vld [vmem:[#allocation2 + $0x18] sm:$0xff]
        %v322 = vld [vmem:[#allocation2 + $0x20] sm:$0xff]
        %v323 = vld [vmem:[#allocation2 + $0x28] sm:$0xff]
        %v324 = vld [vmem:[#allocation2 + $0x30] sm:$0xff]
        %v325 = vld [vmem:[#allocation2 + $0x38] sm:$0xff]
        %v326 = vadd.f32 %v318, %v310
        %v327 = vadd.f32 %v319, %v311
        %v328 = vadd.f32 %v320, %v312
        %v329 = vadd.f32 %v321, %v313
        %v330 = vadd.f32 %v322, %v314
        %v331 = vadd.f32 %v323, %v315
        %v332 = vadd.f32 %v324, %v316
        %v333 = vadd.f32 %v325, %v317
        %334 = vst [vmem:[#allocation2] sm:$0xff] %v326
        %335 = vst [vmem:[#allocation2 + $0x8] sm:$0xff] %v327
        %336 = vst [vmem:[#allocation2 + $0x10] sm:$0xff] %v328
        %337 = vst [vmem:[#allocation2 + $0x18] sm:$0xff] %v329
        %338 = vst [vmem:[#allocation2 + $0x20] sm:$0xff] %v330
        %339 = vst [vmem:[#allocation2 + $0x28] sm:$0xff] %v331
        %340 = vst [vmem:[#allocation2 + $0x30] sm:$0xff] %v332
        %341 = vst [vmem:[#allocation2 + $0x38] sm:$0xff] %v333
        %v342 = vld [vmem:[#allocation3] sm:$0xff]
        %v343 = vld [vmem:[#allocation3 + $0x8] sm:$0xff]
        %v344 = vld [vmem:[#allocation3 + $0x10] sm:$0xff]
        %v345 = vld [vmem:[#allocation3 + $0x18] sm:$0xff]
        %v346 = vld [vmem:[#allocation3 + $0x20] sm:$0xff]
        %v347 = vld [vmem:[#allocation3 + $0x28] sm:$0xff]
        %v348 = vld [vmem:[#allocation3 + $0x30] sm:$0xff]
        %v349 = vld [vmem:[#allocation3 + $0x38] sm:$0xff]
        %v350 = vmax.f32 %v342, %v310
        %v351 = vmax.f32 %v343, %v311
        %v352 = vmax.f32 %v344, %v312
        %v353 = vmax.f32 %v345, %v313
        %v354 = vmax.f32 %v346, %v314
        %v355 = vmax.f32 %v347, %v315
        %v356 = vmax.f32 %v348, %v316
        %v357 = vmax.f32 %v349, %v317
        %358 = vst [vmem:[#allocation3] sm:$0xff] %v350
        %359 = vst [vmem:[#allocation3 + $0x8] sm:$0xff] %v351
        %360 = vst [vmem:[#allocation3 + $0x10] sm:$0xff] %v352
        %361 = vst [vmem:[#allocation3 + $0x18] sm:$0xff] %v353
        %362 = vst [vmem:[#allocation3 + $0x20] sm:$0xff] %v354
        %363 = vst [vmem:[#allocation3 + $0x28] sm:$0xff] %v355
        %364 = vst [vmem:[#allocation3 + $0x30] sm:$0xff] %v356
        %365 = vst [vmem:[#allocation3 + $0x38] sm:$0xff] %v357
        // Predicated region
        $region49: #{tpu_custom_call.1} parent=31 // pred_check
          %p366 = pneg %p234
        $region50: #{tpu_custom_call.1} parent=31 // pred_check_branch
          %368 = sbr.rel (%p366) target = $region52
        $region51: #{tpu_custom_call.1} parent=31 // pred_region
          %v369 = vld [vmem:[#allocation2] sm:$0xff]
          %v370 = vld [vmem:[#allocation2 + $0x8] sm:$0xff]
          %v371 = vld [vmem:[#allocation2 + $0x10] sm:$0xff]
          %v372 = vld [vmem:[#allocation2 + $0x18] sm:$0xff]
          %v373 = vld [vmem:[#allocation2 + $0x20] sm:$0xff]
          %v374 = vld [vmem:[#allocation2 + $0x28] sm:$0xff]
          %v375 = vld [vmem:[#allocation2 + $0x30] sm:$0xff]
          %v376 = vld [vmem:[#allocation2 + $0x38] sm:$0xff]
          %377 = vadd.xlane.f32.xlu0 %v369
          %v378 = vpop.xlane.xlu0 %377
          %379 = vadd.xlane.f32.xlu0 %v370
          %v380 = vpop.xlane.xlu0 %379
          %381 = vadd.xlane.f32.xlu0 %v371
          %v382 = vpop.xlane.xlu0 %381
          %383 = vadd.xlane.f32.xlu0 %v372
          %v384 = vpop.xlane.xlu0 %383
          %385 = vadd.xlane.f32.xlu0 %v373
          %v386 = vpop.xlane.xlu0 %385
          %387 = vadd.xlane.f32.xlu0 %v374
          %v388 = vpop.xlane.xlu0 %387
          %389 = vadd.xlane.f32.xlu0 %v375
          %v390 = vpop.xlane.xlu0 %389
          %391 = vadd.xlane.f32.xlu0 %v376
          %v392 = vpop.xlane.xlu0 %391
          %v393 = vmul.f32 %v378, 0.00390625
          %v394 = vmul.f32 %v380, 0.00390625
          %v395 = vmul.f32 %v382, 0.00390625
          %v396 = vmul.f32 %v384, 0.00390625
          %v397 = vmul.f32 %v386, 0.00390625
          %v398 = vmul.f32 %v388, 0.00390625
          %v399 = vmul.f32 %v390, 0.00390625
          %v400 = vmul.f32 %v392, 0.00390625
          %v401 = vld [vmem:[#allocation3] sm:$0xff]
          %v402 = vld [vmem:[#allocation3 + $0x8] sm:$0xff]
          %v403 = vld [vmem:[#allocation3 + $0x10] sm:$0xff]
          %v404 = vld [vmem:[#allocation3 + $0x18] sm:$0xff]
          %v405 = vld [vmem:[#allocation3 + $0x20] sm:$0xff]
          %v406 = vld [vmem:[#allocation3 + $0x28] sm:$0xff]
          %v407 = vld [vmem:[#allocation3 + $0x30] sm:$0xff]
          %v408 = vld [vmem:[#allocation3 + $0x38] sm:$0xff]
          %409 = vmax.xlane.f32.xlu0 %v401
          %v410 = vpop.xlane.xlu0 %409
          %411 = vmax.xlane.f32.xlu0 %v402
          %v412 = vpop.xlane.xlu0 %411
          %413 = vmax.xlane.f32.xlu0 %v403
          %v414 = vpop.xlane.xlu0 %413
          %415 = vmax.xlane.f32.xlu0 %v404
          %v416 = vpop.xlane.xlu0 %415
          %417 = vmax.xlane.f32.xlu0 %v405
          %v418 = vpop.xlane.xlu0 %417
          %419 = vmax.xlane.f32.xlu0 %v406
          %v420 = vpop.xlane.xlu0 %419
          %421 = vmax.xlane.f32.xlu0 %v407
          %v422 = vpop.xlane.xlu0 %421
          %423 = vmax.xlane.f32.xlu0 %v408
          %v424 = vpop.xlane.xlu0 %423
          %v433 = vlaneseq
          %v434 = vand.u32 %v433, 127
          %v435 = vlaneseq
          %v436 = vshrl.u32 %v435, 7
          %v437 = vsub.s32 %v434, %v436
          %v438 = vrot.slane %v393, %v437
          %v439 = vadd.s32 %v434, 4294967288
          %v440 = vlaneseq
          %v441 = vshrl.u32 %v440, 7
          %v442 = vsub.s32 %v439, %v441
          %v443 = vrot.slane %v394, %v442
          %vm444 = vcmask 130112
          %v445 = vsel %vm444, %v443, %v438
          %v446 = vadd.s32 %v434, 4294967280
          %v447 = vlaneseq
          %v448 = vshrl.u32 %v447, 7
          %v449 = vsub.s32 %v446, %v448
          %v450 = vrot.slane %v395, %v449
          %vm451 = vcmask 195712
          %v452 = vsel %vm451, %v450, %v445
          %v453 = vadd.s32 %v434, 4294967272
          %v454 = vlaneseq
          %v455 = vshrl.u32 %v454, 7
          %v456 = vsub.s32 %v453, %v455
          %v457 = vrot.slane %v396, %v456
          %vm458 = vcmask 261312
          %v459 = vsel %vm458, %v457, %v452
          %v460 = vadd.s32 %v434, 4294967264
          %v461 = vlaneseq
          %v462 = vshrl.u32 %v461, 7
          %v463 = vsub.s32 %v460, %v462
          %v464 = vrot.slane %v397, %v463
          %vm465 = vcmask 326912
          %v466 = vsel %vm465, %v464, %v459
          %v467 = vadd.s32 %v434, 4294967256
          %v468 = vlaneseq
          %v469 = vshrl.u32 %v468, 7
          %v470 = vsub.s32 %v467, %v469
          %v471 = vrot.slane %v398, %v470
          %vm472 = vcmask 392512
          %v473 = vsel %vm472, %v471, %v466
          %v474 = vadd.s32 %v434, 4294967248
          %v475 = vlaneseq
          %v476 = vshrl.u32 %v475, 7
          %v477 = vsub.s32 %v474, %v476
          %v478 = vrot.slane %v399, %v477
          %vm479 = vcmask 458112
          %v480 = vsel %vm479, %v478, %v473
          %v481 = vadd.s32 %v434, 4294967240
          %v482 = vlaneseq
          %v483 = vshrl.u32 %v482, 7
          %v484 = vsub.s32 %v481, %v483
          %v485 = vrot.slane %v400, %v484
          %vm486 = vcmask 523712
          %v487 = vsel %vm486, %v485, %v480
          %v497 = vlaneseq
          %v498 = vshrl.u32 %v497, 7
          %v499 = vsub.s32 %v434, %v498
          %v500 = vrot.slane %v410, %v499
          %v501 = vlaneseq
          %v502 = vshrl.u32 %v501, 7
          %v503 = vsub.s32 %v439, %v502
          %v504 = vrot.slane %v412, %v503
          %v505 = vsel %vm444, %v504, %v500
          %v506 = vlaneseq
          %v507 = vshrl.u32 %v506, 7
          %v508 = vsub.s32 %v446, %v507
          %v509 = vrot.slane %v414, %v508
          %v510 = vsel %vm451, %v509, %v505
          %v511 = vlaneseq
          %v512 = vshrl.u32 %v511, 7
          %v513 = vsub.s32 %v453, %v512
          %v514 = vrot.slane %v416, %v513
          %v515 = vsel %vm458, %v514, %v510
          %v516 = vlaneseq
          %v517 = vshrl.u32 %v516, 7
          %v518 = vsub.s32 %v460, %v517
          %v519 = vrot.slane %v418, %v518
          %v520 = vsel %vm465, %v519, %v515
          %v521 = vlaneseq
          %v522 = vshrl.u32 %v521, 7
          %v523 = vsub.s32 %v467, %v522
          %v524 = vrot.slane %v420, %v523
          %v525 = vsel %vm472, %v524, %v520
          %v526 = vlaneseq
          %v527 = vshrl.u32 %v526, 7
          %v528 = vsub.s32 %v474, %v527
          %v529 = vrot.slane %v422, %v528
          %v530 = vsel %vm479, %v529, %v525
          %v531 = vlaneseq
          %v532 = vshrl.u32 %v531, 7
          %v533 = vsub.s32 %v481, %v532
          %v534 = vrot.slane %v424, %v533
          %v535 = vsel %vm486, %v534, %v530
          %vm537 = vcmask 1040384
          %v538 = vsel %vm537, %v487, %v535
          %v539 = vld [vmem:[#allocation7] sm:$0xff]
          %v540 = vld [vmem:[#allocation7 + $0x8] sm:$0xff]
          %v541 = vld [vmem:[#allocation7 + $0x10] sm:$0xff]
          %v542 = vld [vmem:[#allocation7 + $0x18] sm:$0xff]
          %v543 = vld [vmem:[#allocation7 + $0x20] sm:$0xff]
          %v544 = vld [vmem:[#allocation7 + $0x28] sm:$0xff]
          %v545 = vld [vmem:[#allocation7 + $0x30] sm:$0xff]
          %v546 = vld [vmem:[#allocation7 + $0x38] sm:$0xff]
          %vm547 = vcmask 523264
          %v549 = vsel %vm547, %v538, 0
          %551 = vmatprep.subr.mxu0 0.0
          %552 = vmatpush1.msra.mxu0 %v539
          %553 = vmatprep.subr.mxu0 0.0
          %554 = vmatpush1.msra.mxu0 %v540
          %555 = vmatprep.subr.mxu0 0.0
          %556 = vmatpush1.msra.mxu0 %v541
          %557 = vmatprep.subr.mxu0 0.0
          %558 = vmatpush1.msra.mxu0 %v542
          %559 = vmatprep.subr.mxu0 0.0
          %560 = vmatpush1.msra.mxu0 %v543
          %561 = vmatprep.subr.mxu0 0.0
          %562 = vmatpush1.msra.mxu0 %v544
          %563 = vmatprep.subr.mxu0 0.0
          %564 = vmatpush1.msra.mxu0 %v545
          %565 = vmatprep.subr.mxu0 0.0
          %566 = vmatpush1.msra.mxu0 %v546
          %567 = vmatprep.subr.mxu0 0.0
          %568 = vmatpush1.msra.mxu0 0.0
          %569 = vmatprep.subr.mxu0 0.0
          %570 = vmatpush1.msra.mxu0 0.0
          %571 = vmatprep.subr.mxu0 0.0
          %572 = vmatpush1.msra.mxu0 0.0
          %573 = vmatprep.subr.mxu0 0.0
          %574 = vmatpush1.msra.mxu0 0.0
          %575 = vmatprep.subr.mxu0 0.0
          %576 = vmatpush1.msra.mxu0 0.0
          %577 = vmatprep.subr.mxu0 0.0
          %578 = vmatpush1.msra.mxu0 0.0
          %579 = vmatprep.subr.mxu0 0.0
          %580 = vmatpush1.msra.mxu0 0.0
          %581 = vmatprep.subr.mxu0 0.0
          %582 = vmatpush1.msra.mxu0 0.0
          %583 = vmatprep.subr.mxu0 0.0
          %584 = vmatpush1.msra.mxu0 0.0
          %585 = vmatprep.subr.mxu0 0.0
          %586 = vmatpush1.msra.mxu0 0.0
          %587 = vmatprep.subr.mxu0 0.0
          %588 = vmatpush1.msra.mxu0 0.0
          %589 = vmatprep.subr.mxu0 0.0
          %590 = vmatpush1.msra.mxu0 0.0
          %591 = vmatprep.subr.mxu0 0.0
          %592 = vmatpush1.msra.mxu0 0.0
          %593 = vmatprep.subr.mxu0 0.0
          %594 = vmatpush1.msra.mxu0 0.0
          %595 = vmatprep.subr.mxu0 0.0
          %596 = vmatpush1.msra.mxu0 0.0
          %597 = vmatprep.subr.mxu0 0.0
          %598 = vmatpush1.msra.mxu0 0.0
          %599 = vmatprep.subr.mxu0 0.0
          %600 = vmatpush1.msra.mxu0 0.0
          %601 = vmatprep.subr.mxu0 0.0
          %602 = vmatpush1.msra.mxu0 0.0
          %603 = vmatprep.subr.mxu0 0.0
          %604 = vmatpush1.msra.mxu0 0.0
          %605 = vmatprep.subr.mxu0 0.0
          %606 = vmatpush1.msra.mxu0 0.0
          %607 = vmatprep.subr.mxu0 0.0
          %608 = vmatpush1.msra.mxu0 0.0
          %609 = vmatprep.subr.mxu0 0.0
          %610 = vmatpush1.msra.mxu0 0.0
          %611 = vmatprep.subr.mxu0 0.0
          %612 = vmatpush1.msra.mxu0 0.0
          %613 = vmatprep.subr.mxu0 0.0
          %614 = vmatpush1.msra.mxu0 0.0
          %615 = vmatprep.mubr.f32.mxu0 0.0
          %616 = vmatmul.mubr.f32.gmra.mrb[0].mxu0 %v549
          %v617 = vpop.f32.mrb[0].mxu0
          %v618 = vadd.f32 0.0, %v617
          %v619 = vpop.f32.mrb[0].mxu0
          %620 = vdwg.mxu0
          %v621 = vmax.f32 %v618, 0.0
          %v622 = vld [vmem:[#allocation9] sm:$0xff]
          %v623 = vld [vmem:[#allocation9 + $0x8] sm:$0xff]
          %v624 = vld [vmem:[#allocation9 + $0x10] sm:$0xff]
          %v625 = vld [vmem:[#allocation9 + $0x18] sm:$0xff]
          %v626 = vld [vmem:[#allocation9 + $0x20] sm:$0xff]
          %v627 = vld [vmem:[#allocation9 + $0x28] sm:$0xff]
          %v628 = vld [vmem:[#allocation9 + $0x30] sm:$0xff]
          %v629 = vld [vmem:[#allocation9 + $0x38] sm:$0xff]
          %v630 = vld [vmem:[#allocation9 + $0x40] sm:$0xff]
          %v631 = vld [vmem:[#allocation9 + $0x48] sm:$0xff]
          %v632 = vld [vmem:[#allocation9 + $0x50] sm:$0xff]
          %v633 = vld [vmem:[#allocation9 + $0x58] sm:$0xff]
          %v634 = vld [vmem:[#allocation9 + $0x60] sm:$0xff]
          %v635 = vld [vmem:[#allocation9 + $0x68] sm:$0xff]
          %v636 = vld [vmem:[#allocation9 + $0x70] sm:$0xff]
          %v637 = vld [vmem:[#allocation9 + $0x78] sm:$0xff]
          %638 = vmatprep.subr.mxu0 0.0
          %639 = vmatpush1.msra.mxu0 %v622
          %640 = vmatprep.subr.mxu0 0.0
          %641 = vmatpush1.msra.mxu0 %v623
          %642 = vmatprep.subr.mxu0 0.0
          %643 = vmatpush1.msra.mxu0 %v624
          %644 = vmatprep.subr.mxu0 0.0
          %645 = vmatpush1.msra.mxu0 %v625
          %646 = vmatprep.subr.mxu0 0.0
          %647 = vmatpush1.msra.mxu0 %v626
          %648 = vmatprep.subr.mxu0 0.0
          %649 = vmatpush1.msra.mxu0 %v627
          %650 = vmatprep.subr.mxu0 0.0
          %651 = vmatpush1.msra.mxu0 %v628
          %652 = vmatprep.subr.mxu0 0.0
          %653 = vmatpush1.msra.mxu0 %v629
          %654 = vmatprep.subr.mxu0 0.0
          %655 = vmatpush1.msra.mxu0 %v630
          %656 = vmatprep.subr.mxu0 0.0
          %657 = vmatpush1.msra.mxu0 %v631
          %658 = vmatprep.subr.mxu0 0.0
          %659 = vmatpush1.msra.mxu0 %v632
          %660 = vmatprep.subr.mxu0 0.0
          %661 = vmatpush1.msra.mxu0 %v633
          %662 = vmatprep.subr.mxu0 0.0
          %663 = vmatpush1.msra.mxu0 %v634
          %664 = vmatprep.subr.mxu0 0.0
          %665 = vmatpush1.msra.mxu0 %v635
          %666 = vmatprep.subr.mxu0 0.0
          %667 = vmatpush1.msra.mxu0 %v636
          %668 = vmatprep.subr.mxu0 0.0
          %669 = vmatpush1.msra.mxu0 %v637
          %670 = vmatprep.subr.mxu0 0.0
          %671 = vmatpush1.msra.mxu0 0.0
          %672 = vmatprep.subr.mxu0 0.0
          %673 = vmatpush1.msra.mxu0 0.0
          %674 = vmatprep.subr.mxu0 0.0
          %675 = vmatpush1.msra.mxu0 0.0
          %676 = vmatprep.subr.mxu0 0.0
          %677 = vmatpush1.msra.mxu0 0.0
          %678 = vmatprep.subr.mxu0 0.0
          %679 = vmatpush1.msra.mxu0 0.0
          %680 = vmatprep.subr.mxu0 0.0
          %681 = vmatpush1.msra.mxu0 0.0
          %682 = vmatprep.subr.mxu0 0.0
          %683 = vmatpush1.msra.mxu0 0.0
          %684 = vmatprep.subr.mxu0 0.0
          %685 = vmatpush1.msra.mxu0 0.0
          %686 = vmatprep.subr.mxu0 0.0
          %687 = vmatpush1.msra.mxu0 0.0
          %688 = vmatprep.subr.mxu0 0.0
          %689 = vmatpush1.msra.mxu0 0.0
          %690 = vmatprep.subr.mxu0 0.0
          %691 = vmatpush1.msra.mxu0 0.0
          %692 = vmatprep.subr.mxu0 0.0
          %693 = vmatpush1.msra.mxu0 0.0
          %694 = vmatprep.subr.mxu0 0.0
          %695 = vmatpush1.msra.mxu0 0.0
          %696 = vmatprep.subr.mxu0 0.0
          %697 = vmatpush1.msra.mxu0 0.0
          %698 = vmatprep.subr.mxu0 0.0
          %699 = vmatpush1.msra.mxu0 0.0
          %700 = vmatprep.subr.mxu0 0.0
          %701 = vmatpush1.msra.mxu0 0.0
          %702 = vmatprep.mubr.f32.mxu0 0.0
          %703 = vmatmul.mubr.f32.gmra.mrb[0].mxu0 %v621
          %v704 = vpop.f32.mrb[0].mxu0
          %v705 = vadd.f32 0.0, %v704
          %v706 = vpop.f32.mrb[0].mxu0
          %707 = vdwg.mxu0
          %v709 = vrot.slane %v705, 1
          %v711 = vadd.f32 %v705, %v709
          %v712 = vxor.u32 %v711, 2147483648
          %v713 = vmul.f32 %v712, 1.442695
          %v714 = vpow.pop %v713
          %v715 = vadd.f32 %v714, 1.0
          %v716 = vrcp.pop %v715
          %v717 = vmul.f32 1.0, %v716
          %718 = vst [vmem:[%s232] sm:$0x1] %v717
        $region52: #{tpu_custom_call.1} parent=31 // pred_fallthru
          _
        %s719 = sand.u32 %s111, 1
        %s720 = scalar_lea.sflag [#allocation6], %s719
        %s721 = sand.u32 %s111, 1
        %s722 = scalar_lea.vmem [#allocation10], %s721
        // Predicated region
        $region53: #{tpu_custom_call.1} parent=31 // pred_check
          %p723 = pneg %p121
        $region54: #{tpu_custom_call.1} parent=31 // pred_check_branch
          %725 = sbr.rel (%p723) target = $region56
        $region55: #{tpu_custom_call.1} parent=31 // pred_region
          %s727 = ssub.s32 16, 16
          %728 = vsyncadd %s720, %s727
          %s729 = smul.addr %s25, 16
          %s730 = scalar_lea.hbm %s3, %s729
          %s732 = sshll.u32 %s722, 4
          %s733 = int_to_ptr.vmem [resolvable:$true] %s732
          %735 = dma.vmem_to_hbm [thread:$0]  %s733, 16, %s730, %s720
        $region56: #{tpu_custom_call.1} parent=31 // pred_fallthru
          _
      $region32: #{tpu_custom_call.1} parent=5 // pred_fallthru
        _
      %p736 = scmp.le.s32.totalorder 2, %s16
      // Predicated region
      $region57: #{tpu_custom_call.1} parent=5 // pred_check
        %p737 = pneg %p736
      $region58: #{tpu_custom_call.1} parent=5 // pred_check_branch
        %739 = sbr.rel (%p737) target = $region60
      $region59: #{tpu_custom_call.1} parent=5 // pred_region
        %s740 = ssub.s32 %s16, 2
        // Predicated region
        $region61: #{tpu_custom_call.1} parent=59 // pred_check
          %p741 = pneg %p127
        $region62: #{tpu_custom_call.1} parent=59 // pred_check_branch
          %743 = sbr.rel (%p741) target = $region64
        $region63: #{tpu_custom_call.1} parent=59 // pred_region
          %s744 = sand.u32 %s112, 1
          %s745 = scalar_lea.sflag [#allocation6], %s744
          %s746 = sand.u32 %s112, 1
          %s747 = scalar_lea.vmem [#allocation10], %s746
          %748 = dma.done %s745, 16
        $region64: #{tpu_custom_call.1} parent=59 // pred_fallthru
          _
      $region60: #{tpu_custom_call.1} parent=5 // pred_fallthru
        _
    $region6: #{tpu_custom_call.1} parent=1 // loop_footer
      %s20 = sadd.s32 1, %s16
    $region7: #{tpu_custom_call.1} parent=1 // loop_footer_branch
      %15 = sbr.rel target = $region3
    $region8: #{tpu_custom_call.1} parent=1 // loop_exit
      _
    %749 = vsyncpa [#allocation5], 1
    %s750 = scalar_lea.sflag [#allocation5], 1
    %751 = vsyncpa %s750, 1
    %752 = vsyncpa [#allocation8], 1
    %753 = vsyncpa [#allocation6], 1
    %s754 = scalar_lea.sflag [#allocation6], 1
    %755 = vsyncpa %s754, 1

</llo_original>
